<compile_context>
chip_gen: v7x
topology: tpu7x:2x2x1
jax: 0.10.0
libtpu: 0.0.40
codegen_flags: <defaults>
</compile_context>

<pallas_src>
import jax
import jax.numpy as jnp
from jax.experimental import pallas as pl
from jax.experimental.pallas import tpu as pltpu


def _round_up(x, m):
    return ((x + m - 1) // m) * m


def _ngcf_agg_kernel(a_ref, u_ref, invdeg_ref, o_ref):
    """out_block += A_tile @ U_tile over the K grid axis.

    a_ref:      (tm, tk)    int8 adjacency tile (0/1), dominant HBM stream
    u_ref:      (tk, d_pad) f32  user features
    invdeg_ref: (tm, 1)     f32  graph-static 1/degree (0 for isolated items)
    o_ref:      (tm, d_pad) f32  output; block index ignores k -> resident in
                                 VMEM across the K axis, used as accumulator
    """
    k = pl.program_id(1)

    @pl.when(k == 0)
    def _():
        o_ref[...] = jnp.zeros_like(o_ref)

    # int8 halves the HBM stream; cheap VPU cast, f32 MXU accumulation.
    a = a_ref[...].astype(jnp.float32)
    o_ref[...] += jnp.dot(a, u_ref[...], preferred_element_type=jnp.float32)

    @pl.when(k == pl.num_programs(1) - 1)
    def _():
        # mean = sum * (1/deg); 1/deg precomputed once per graph.
        o_ref[...] = o_ref[...] * invdeg_ref[...]


def _choose_tiles(num_item, num_user, d_pad, *, vmem_budget=12 << 20):
    """Pick (tm, tk) for the memory-bound dense aggregation.

    Budget is conservative (fits v5e's 16 MiB scoped-VMEM default, well under
    the 32 MiB defaults on v6e/v7x), so no vmem_limit override is needed.
    """
    m_full = _round_up(num_item, 128)
    k_full = _round_up(num_user, 128)

    # U tile: make it the whole (padded) user matrix when small, so its block
    # index is constant over the grid and Pallas DMAs it exactly once.
    if 2 * k_full * d_pad * 4 <= (4 << 20):
        tk = k_full
    else:
        tk = min(1024, k_full)

    # Remaining budget: int8 A double buffer + f32 output double buffer.
    remaining = vmem_budget - 2 * tk * d_pad * 4
    per_row = 2 * tk * 1 + 2 * d_pad * 4
    tm = max(128, (remaining // per_row) // 128 * 128)
    tm = min(tm, m_full)

    # v7x has 2 TensorCores: keep >= 2 row blocks when the problem allows so
    # the "parallel" row axis can actually be split across cores.
    if m_full >= 256 and m_full // tm < 2:
        tm = max(128, _round_up(m_full // 2, 128))
    return tm, tk


def make_ngcf_forward(adj, embed_dim, num_layers):
    """Graph-static preprocessing (done ONCE) + a jitted per-call forward.

    adj: dense (num_item, num_user) 0/1 'checkin' adjacency.
    Returns forward(user_embed, item_embed) -> {'item': (num_item, embed_dim)}.
    """
    assert num_layers >= 1
    num_item, num_user = adj.shape

    d_pad = _round_up(embed_dim, 128)           # lane-dense output stores
    tm, tk = _choose_tiles(num_item, num_user, d_pad)
    m_pad = _round_up(num_item, tm)
    k_pad = _round_up(num_user, tk)

    # ---- graph-static, computed once (NOT per forward call) ----
    adj_i8 = jnp.zeros((m_pad, k_pad), jnp.int8)
    adj_i8 = adj_i8.at[:num_item, :num_user].set(adj.astype(jnp.int8))
    deg = jnp.sum(adj.astype(jnp.float32), axis=1, keepdims=True)
    inv_deg = jnp.where(deg > 0, 1.0 / deg, 0.0)          # exact, per graph
    inv_deg_p = jnp.zeros((m_pad, 1), jnp.float32).at[:num_item].set(inv_deg)
    adj_i8, inv_deg_p = jax.block_until_ready(
        jax.device_put((adj_i8, inv_deg_p)))

    agg = pl.pallas_call(
        _ngcf_agg_kernel,
        out_shape=jax.ShapeDtypeStruct((m_pad, d_pad), jnp.float32),
        grid_spec=pltpu.PrefetchScalarGridSpec(
            num_scalar_prefetch=0,
            grid=(m_pad // tm, k_pad // tk),
            in_specs=[
                pl.BlockSpec((tm, tk), lambda i, k: (i, k)),      # A (int8)
                pl.BlockSpec((tk, d_pad), lambda i, k: (k, 0)),   # U (f32)
                pl.BlockSpec((tm, 1), lambda i, k: (i, 0)),       # 1/deg
            ],
            out_specs=pl.BlockSpec((tm, d_pad), lambda i, k: (i, 0)),
        ),
        compiler_params=pltpu.CompilerParams(
            dimension_semantics=("parallel", "arbitrary")),
    )

    # TODO(synk): for large, realistically sparse graphs a CSR/edge-list
    # kernel with scalar-prefetched row offsets (PrefetchScalarGridSpec) would
    # skip the ~90% zero entries of the dense adjacency entirely.

    @jax.jit
    def forward(user_embed, item_embed):
        del item_embed  # dst-only node type: never reaches the 'item' output
        # Per-call pad of the (small) user parameter matrix only.
        u_pad = jnp.zeros((k_pad, d_pad), jnp.float32)
        u_pad = u_pad.at[:num_user, :embed_dim].set(
            user_embed.astype(jnp.float32))
        out = agg(adj_i8, u_pad, inv_deg_p)
        return {"item": out[:num_item, :embed_dim]}

    return forward


def init_embedding(key, num_nodes, embed_dim):
    # nn.init.uniform_(embed, -0.001, 0.001)
    return jax.random.uniform(
        key, (num_nodes, embed_dim), dtype=jnp.float32,
        minval=-0.001, maxval=0.001)


if __name__ == "__main__":
    embed_dim = 32
    num_user = 64
    num_item = 128
    nhiddens = [embed_dim, embed_dim, embed_dim]   # 2 gconv layers, no weights
    num_layers = len(nhiddens) - 1

    key = jax.random.PRNGKey(0)
    k_u, k_i, k_a = jax.random.split(key, 3)

    user_embed = init_embedding(k_u, num_user, embed_dim)
    item_embed = init_embedding(k_i, num_item, embed_dim)

    # deterministic synthetic bipartite 'checkin' adjacency (item x user)
    adj = (jax.random.uniform(k_a, (num_item, num_user)) < 0.1).astype(
        jnp.float32)

    forward = make_ngcf_forward(adj, embed_dim, num_layers)
    out = forward(user_embed, item_embed)
    jax.block_until_ready(out["item"])

    # plain-JAX f32 reference: A is exact 0/1 and U stays f32 in the kernel,
    # so the only deltas are matmul precision/accumulation order and the
    # (1/deg)-multiply vs divide rounding.
    deg = jnp.sum(adj, axis=1, keepdims=True)
    ref = jnp.where(deg > 0, (adj @ user_embed) / deg, 0.0)
    assert out["item"].shape == (num_item, embed_dim)
    assert out["item"].dtype == jnp.float32
    assert jnp.allclose(out["item"], ref, atol=1e-6, rtol=2e-3), (
        float(jnp.max(jnp.abs(out["item"] - ref))))

    print("KERNEL_OK")
</pallas_src>

<mosaic_0001>
module attributes {stable_mosaic.version = 11 : i64} {
  func.func @_ngcf_agg_kernel(%arg0: i32, %arg1: i32, %arg2: memref<128x128xi8, #tpu.memory_space<vmem>>, %arg3: memref<128x128xf32, #tpu.memory_space<vmem>>, %arg4: memref<128x1xf32, #tpu.memory_space<vmem>>, %arg5: memref<128x128xf32, #tpu.memory_space<vmem>>) attributes {dimension_semantics = [#tpu.dimension_semantics<parallel>, #tpu.dimension_semantics<arbitrary>], iteration_bounds = array<i64: 1, 1>, scalar_prefetch = 0 : i64, scratch_operands = 0 : i64, tpu.core_type = #tpu.core_type<tc>, window_params = [{transform_indices = @transform_0, window_bounds = array<i64: 128, 128>}, {transform_indices = @transform_1, window_bounds = array<i64: 128, 128>}, {transform_indices = @transform_2, window_bounds = array<i64: 128, 1>}, {transform_indices = @transform_3, window_bounds = array<i64: 128, 128>}]} {
    %c0_i32 = arith.constant 0 : i32
    %0 = arith.cmpi eq, %arg1, %c0_i32 : i32
    %1 = arith.extui %0 : i1 to i32
    %c0_i32_0 = arith.constant 0 : i32
    %2 = arith.cmpi ne, %1, %c0_i32_0 : i32
    scf.if %2 {
      %cst_10 = arith.constant 0.000000e+00 : f32
      %13 = vector.broadcast %cst_10 : f32 to vector<128x128xf32>
      %c0_11 = arith.constant 0 : index
      %c0_12 = arith.constant 0 : index
      %14 = vector.load %arg5[%c0_11, %c0_12] : memref<128x128xf32, #tpu.memory_space<vmem>>, vector<128x128xf32>
      tpu.vector_store %arg5[%c0_11, %c0_12], %13 {strides = array<i32>} : memref<128x128xf32, #tpu.memory_space<vmem>>, vector<128x128xf32>,
    } else {
    }
    %c0 = arith.constant 0 : index
    %c0_1 = arith.constant 0 : index
    %3 = vector.load %arg2[%c0, %c0_1] : memref<128x128xi8, #tpu.memory_space<vmem>>, vector<128x128xi8>
    %4 = arith.sitofp %3 : vector<128x128xi8> to vector<128x128xf32>
    %c0_2 = arith.constant 0 : index
    %c0_3 = arith.constant 0 : index
    %5 = vector.load %arg5[%c0_2, %c0_3] : memref<128x128xf32, #tpu.memory_space<vmem>>, vector<128x128xf32>
    %c0_4 = arith.constant 0 : index
    %c0_5 = arith.constant 0 : index
    %6 = vector.load %arg3[%c0_4, %c0_5] : memref<128x128xf32, #tpu.memory_space<vmem>>, vector<128x128xf32>
    %cst = arith.constant dense<0.000000e+00> : vector<128x128xf32>
    %7 = tpu.matmul %4, %6, %cst {dimension_numbers = #tpu.dot_dimension_numbers<[1], [0], [0], [1], [0, 0, 1, 1], [], []>} : vector<128x128xf32>, vector<128x128xf32>, vector<128x128xf32> -> vector<128x128xf32>
    %8 = arith.addf %5, %7 : vector<128x128xf32>
    %c0_6 = arith.constant 0 : index
    %c0_7 = arith.constant 0 : index
    %9 = vector.load %arg5[%c0_6, %c0_7] : memref<128x128xf32, #tpu.memory_space<vmem>>, vector<128x128xf32>
    tpu.vector_store %arg5[%c0_6, %c0_7], %8 {strides = array<i32>} : memref<128x128xf32, #tpu.memory_space<vmem>>, vector<128x128xf32>,
    %c0_i32_8 = arith.constant 0 : i32
    %10 = arith.cmpi eq, %arg1, %c0_i32_8 : i32
    %11 = arith.extui %10 : i1 to i32
    %c0_i32_9 = arith.constant 0 : i32
    %12 = arith.cmpi ne, %11, %c0_i32_9 : i32
    scf.if %12 {
      %c0_10 = arith.constant 0 : index
      %c0_11 = arith.constant 0 : index
      %13 = vector.load %arg5[%c0_10, %c0_11] : memref<128x128xf32, #tpu.memory_space<vmem>>, vector<128x128xf32>
      %c0_12 = arith.constant 0 : index
      %c0_13 = arith.constant 0 : index
      %14 = vector.load %arg4[%c0_12, %c0_13] : memref<128x1xf32, #tpu.memory_space<vmem>>, vector<128x1xf32>
      %15 = vector.broadcast %14 : vector<128x1xf32> to vector<128x128xf32>
      %16 = arith.mulf %13, %15 : vector<128x128xf32>
      %c0_14 = arith.constant 0 : index
      %c0_15 = arith.constant 0 : index
      %17 = vector.load %arg5[%c0_14, %c0_15] : memref<128x128xf32, #tpu.memory_space<vmem>>, vector<128x128xf32>
      tpu.vector_store %arg5[%c0_14, %c0_15], %16 {strides = array<i32>} : memref<128x128xf32, #tpu.memory_space<vmem>>, vector<128x128xf32>,
    } else {
    }
    return
  }
  func.func @transform_0(%arg0: i32, %arg1: i32) -> (i32, i32) {
    %c0_i32 = arith.constant 0 : i32
    return %arg0, %arg1 : i32, i32
  }
  func.func @transform_1(%arg0: i32, %arg1: i32) -> (i32, i32) {
    %c0_i32 = arith.constant 0 : i32
    %c0_i32_0 = arith.constant 0 : i32
    return %arg1, %c0_i32 : i32, i32
  }
  func.func @transform_2(%arg0: i32, %arg1: i32) -> (i32, i32) {
    %c0_i32 = arith.constant 0 : i32
    %c0_i32_0 = arith.constant 0 : i32
    return %arg0, %c0_i32 : i32, i32
  }
  func.func @transform_3(%arg0: i32, %arg1: i32) -> (i32, i32) {
    %c0_i32 = arith.constant 0 : i32
    %c0_i32_0 = arith.constant 0 : i32
    return %arg0, %c0_i32 : i32, i32
  }
}

</mosaic_0001>

<llo_original>
// kernel: forward.1
$region0: #{forward.1}
  #allocation0 [shape = 'u32[]', space=smem, size = 0x4, offset = 0x4, fixed_abs, tag = 'smem constant byte address 0x4 - core index']
  #allocation1 [shape = 'u32[144,128]{1,0:T(1,128)}', space=vmem, size = 0x12000, scoped, tag = 'internal scratch']
  %s0 = inlined_call_operand.vmem [shape: s8[128,128], index: 0, kind: input, shape index: {}]
  %s1 = inlined_call_operand.vmem [shape: f32[128,128], index: 1, kind: input, shape index: {}]
  %s2 = inlined_call_operand.vmem [shape: f32[128,1], index: 2, kind: input, shape index: {}]
  %s3 = inlined_call_operand.vmem [shape: f32[128,128], index: 3, kind: output, shape index: {}]
  %s4 = sld [smem:[#allocation0]]
  $region30: #{forward.1} parent=0
    _
  %s6 = ssub.s32 1, %s4
  %s7 = scalar_select 0, %s6, %s4
  // Predicated region
  $region2: #{forward.1} parent=0 // pred_check
    _
  $region3: #{forward.1} parent=0 // pred_check_branch
    %9 = sbr.rel (0) target = $region5
  $region4: #{forward.1} parent=0 // pred_region
    _
  $region5: #{forward.1} parent=0 // pred_fallthru
    _
  // Predicated region
  $region6: #{forward.1} parent=0 // pred_check
    _
  $region7: #{forward.1} parent=0 // pred_check_branch
    %11 = sbr.rel (0) target = $region9
  $region8: #{forward.1} parent=0 // pred_region
    _
  $region9: #{forward.1} parent=0 // pred_fallthru
    _
  // Predicated region
  $region10: #{forward.1} parent=0 // pred_check
    _
  $region11: #{forward.1} parent=0 // pred_check_branch
    %13 = sbr.rel (0) target = $region13
  $region12: #{forward.1} parent=0 // pred_region
    _
  $region13: #{forward.1} parent=0 // pred_fallthru
    _
  %p14 = scmp.eq.s32.totalorder 0, 0
  // Predicated region
  $region14: #{forward.1} parent=0 // pred_check
    %p15 = pneg %p14
  $region15: #{forward.1} parent=0 // pred_check_branch
    %17 = sbr.rel (%p15) target = $region17
  $region16: #{forward.1} parent=0 // pred_region
    %18 = vst [vmem:[%s3] sm:$0xff] 0.0
    %19 = vst [vmem:[%s3 + $0x8] sm:$0xff] 0.0
    %20 = vst [vmem:[%s3 + $0x10] sm:$0xff] 0.0
    %21 = vst [vmem:[%s3 + $0x18] sm:$0xff] 0.0
    %22 = vst [vmem:[%s3 + $0x20] sm:$0xff] 0.0
    %23 = vst [vmem:[%s3 + $0x28] sm:$0xff] 0.0
    %24 = vst [vmem:[%s3 + $0x30] sm:$0xff] 0.0
    %25 = vst [vmem:[%s3 + $0x38] sm:$0xff] 0.0
    %26 = vst [vmem:[%s3 + $0x40] sm:$0xff] 0.0
    %27 = vst [vmem:[%s3 + $0x48] sm:$0xff] 0.0
    %28 = vst [vmem:[%s3 + $0x50] sm:$0xff] 0.0
    %29 = vst [vmem:[%s3 + $0x58] sm:$0xff] 0.0
    %30 = vst [vmem:[%s3 + $0x60] sm:$0xff] 0.0
    %31 = vst [vmem:[%s3 + $0x68] sm:$0xff] 0.0
    %32 = vst [vmem:[%s3 + $0x70] sm:$0xff] 0.0
    %33 = vst [vmem:[%s3 + $0x78] sm:$0xff] 0.0
  $region17: #{forward.1} parent=0 // pred_fallthru
    _
  %v34 = vld [vmem:[%s0] sm:$0xff]
  %v35 = vld [vmem:[%s0 + $0x8] sm:$0xff]
  %v36 = vld [vmem:[%s0 + $0x10] sm:$0xff]
  %v37 = vld [vmem:[%s0 + $0x18] sm:$0xff]
  %v38 = vunpack.c.0.s8 %v34
  %v39 = vunpack.c.1.s8 %v34
  %v40 = vunpack.c.2.s8 %v34
  %v41 = vunpack.c.3.s8 %v34
  %v42 = vunpack.c.0.s8 %v35
  %v43 = vunpack.c.1.s8 %v35
  %v44 = vunpack.c.2.s8 %v35
  %v45 = vunpack.c.3.s8 %v35
  %v46 = vunpack.c.0.s8 %v36
  %v47 = vunpack.c.1.s8 %v36
  %v48 = vunpack.c.2.s8 %v36
  %v49 = vunpack.c.3.s8 %v36
  %v50 = vunpack.c.0.s8 %v37
  %v51 = vunpack.c.1.s8 %v37
  %v52 = vunpack.c.2.s8 %v37
  %v53 = vunpack.c.3.s8 %v37
  %v54 = vcvt.s32.f32 %v38
  %v55 = vcvt.s32.f32 %v39
  %v56 = vcvt.s32.f32 %v40
  %v57 = vcvt.s32.f32 %v41
  %v58 = vcvt.s32.f32 %v42
  %v59 = vcvt.s32.f32 %v43
  %v60 = vcvt.s32.f32 %v44
  %v61 = vcvt.s32.f32 %v45
  %v62 = vcvt.s32.f32 %v46
  %v63 = vcvt.s32.f32 %v47
  %v64 = vcvt.s32.f32 %v48
  %v65 = vcvt.s32.f32 %v49
  %v66 = vcvt.s32.f32 %v50
  %v67 = vcvt.s32.f32 %v51
  %v68 = vcvt.s32.f32 %v52
  %v69 = vcvt.s32.f32 %v53
  %v70 = vld [vmem:[%s3] sm:$0xff]
  %v71 = vld [vmem:[%s3 + $0x8] sm:$0xff]
  %v72 = vld [vmem:[%s3 + $0x10] sm:$0xff]
  %v73 = vld [vmem:[%s3 + $0x18] sm:$0xff]
  %v74 = vld [vmem:[%s3 + $0x20] sm:$0xff]
  %v75 = vld [vmem:[%s3 + $0x28] sm:$0xff]
  %v76 = vld [vmem:[%s3 + $0x30] sm:$0xff]
  %v77 = vld [vmem:[%s3 + $0x38] sm:$0xff]
  %v78 = vld [vmem:[%s3 + $0x40] sm:$0xff]
  %v79 = vld [vmem:[%s3 + $0x48] sm:$0xff]
  %v80 = vld [vmem:[%s3 + $0x50] sm:$0xff]
  %v81 = vld [vmem:[%s3 + $0x58] sm:$0xff]
  %v82 = vld [vmem:[%s3 + $0x60] sm:$0xff]
  %v83 = vld [vmem:[%s3 + $0x68] sm:$0xff]
  %v84 = vld [vmem:[%s3 + $0x70] sm:$0xff]
  %v85 = vld [vmem:[%s3 + $0x78] sm:$0xff]
  %v86 = vld [vmem:[%s1] sm:$0xff]
  %v87 = vld [vmem:[%s1 + $0x8] sm:$0xff]
  %v88 = vld [vmem:[%s1 + $0x10] sm:$0xff]
  %v89 = vld [vmem:[%s1 + $0x18] sm:$0xff]
  %v90 = vld [vmem:[%s1 + $0x20] sm:$0xff]
  %v91 = vld [vmem:[%s1 + $0x28] sm:$0xff]
  %v92 = vld [vmem:[%s1 + $0x30] sm:$0xff]
  %v93 = vld [vmem:[%s1 + $0x38] sm:$0xff]
  %v94 = vld [vmem:[%s1 + $0x40] sm:$0xff]
  %v95 = vld [vmem:[%s1 + $0x48] sm:$0xff]
  %v96 = vld [vmem:[%s1 + $0x50] sm:$0xff]
  %v97 = vld [vmem:[%s1 + $0x58] sm:$0xff]
  %v98 = vld [vmem:[%s1 + $0x60] sm:$0xff]
  %v99 = vld [vmem:[%s1 + $0x68] sm:$0xff]
  %v100 = vld [vmem:[%s1 + $0x70] sm:$0xff]
  %v101 = vld [vmem:[%s1 + $0x78] sm:$0xff]
  %102 = vmatprep.subr.mxu0 0.0
  %103 = vmatpush1.msra.mxu0 %v86
  %104 = vmatprep.subr.mxu0 0.0
  %105 = vmatpush1.msra.mxu0 %v87
  %106 = vmatprep.subr.mxu0 0.0
  %107 = vmatpush1.msra.mxu0 %v88
  %108 = vmatprep.subr.mxu0 0.0
  %109 = vmatpush1.msra.mxu0 %v89
  %110 = vmatprep.subr.mxu0 0.0
  %111 = vmatpush1.msra.mxu0 %v90
  %112 = vmatprep.subr.mxu0 0.0
  %113 = vmatpush1.msra.mxu0 %v91
  %114 = vmatprep.subr.mxu0 0.0
  %115 = vmatpush1.msra.mxu0 %v92
  %116 = vmatprep.subr.mxu0 0.0
  %117 = vmatpush1.msra.mxu0 %v93
  %118 = vmatprep.subr.mxu0 0.0
  %119 = vmatpush1.msra.mxu0 %v94
  %120 = vmatprep.subr.mxu0 0.0
  %121 = vmatpush1.msra.mxu0 %v95
  %122 = vmatprep.subr.mxu0 0.0
  %123 = vmatpush1.msra.mxu0 %v96
  %124 = vmatprep.subr.mxu0 0.0
  %125 = vmatpush1.msra.mxu0 %v97
  %126 = vmatprep.subr.mxu0 0.0
  %127 = vmatpush1.msra.mxu0 %v98
  %128 = vmatprep.subr.mxu0 0.0
  %129 = vmatpush1.msra.mxu0 %v99
  %130 = vmatprep.subr.mxu0 0.0
  %131 = vmatpush1.msra.mxu0 %v100
  %132 = vmatprep.subr.mxu0 0.0
  %133 = vmatpush1.msra.mxu0 %v101
  %134 = vmatprep.subr.mxu0 0.0
  %135 = vmatpush1.msra.mxu0 0.0
  %136 = vmatprep.subr.mxu0 0.0
  %137 = vmatpush1.msra.mxu0 0.0
  %138 = vmatprep.subr.mxu0 0.0
  %139 = vmatpush1.msra.mxu0 0.0
  %140 = vmatprep.subr.mxu0 0.0
  %141 = vmatpush1.msra.mxu0 0.0
  %142 = vmatprep.subr.mxu0 0.0
  %143 = vmatpush1.msra.mxu0 0.0
  %144 = vmatprep.subr.mxu0 0.0
  %145 = vmatpush1.msra.mxu0 0.0
  %146 = vmatprep.subr.mxu0 0.0
  %147 = vmatpush1.msra.mxu0 0.0
  %148 = vmatprep.subr.mxu0 0.0
  %149 = vmatpush1.msra.mxu0 0.0
  %150 = vmatprep.subr.mxu0 0.0
  %151 = vmatpush1.msra.mxu0 0.0
  %152 = vmatprep.subr.mxu0 0.0
  %153 = vmatpush1.msra.mxu0 0.0
  %154 = vmatprep.subr.mxu0 0.0
  %155 = vmatpush1.msra.mxu0 0.0
  %156 = vmatprep.subr.mxu0 0.0
  %157 = vmatpush1.msra.mxu0 0.0
  %158 = vmatprep.subr.mxu0 0.0
  %159 = vmatpush1.msra.mxu0 0.0
  %160 = vmatprep.subr.mxu0 0.0
  %161 = vmatpush1.msra.mxu0 0.0
  %162 = vmatprep.subr.mxu0 0.0
  %163 = vmatpush1.msra.mxu0 0.0
  %164 = vmatprep.subr.mxu0 0.0
  %165 = vmatpush1.msra.mxu0 0.0
  %166 = vmatprep.mubr.f32.mxu0 0.0
  %167 = vmatmul.mubr.f32.gmra.mrb[0].mxu0 %v54
  %v168 = vpop.f32.mrb[0].mxu0
  %v169 = vadd.f32 0.0, %v168
  %v170 = vpop.f32.mrb[0].mxu0
  %171 = vmatprep.mubr.f32.mxu0 0.0
  %172 = vmatmul.mubr.f32.gmra.mrb[0].mxu0 %v55
  %v173 = vpop.f32.mrb[0].mxu0
  %v174 = vadd.f32 0.0, %v173
  %v175 = vpop.f32.mrb[0].mxu0
  %176 = vmatprep.mubr.f32.mxu0 0.0
  %177 = vmatmul.mubr.f32.gmra.mrb[0].mxu0 %v56
  %v178 = vpop.f32.mrb[0].mxu0
  %v179 = vadd.f32 0.0, %v178
  %v180 = vpop.f32.mrb[0].mxu0
  %181 = vmatprep.mubr.f32.mxu0 0.0
  %182 = vmatmul.mubr.f32.gmra.mrb[0].mxu0 %v57
  %v183 = vpop.f32.mrb[0].mxu0
  %v184 = vadd.f32 0.0, %v183
  %v185 = vpop.f32.mrb[0].mxu0
  %186 = vmatprep.mubr.f32.mxu0 0.0
  %187 = vmatmul.mubr.f32.gmra.mrb[0].mxu0 %v58
  %v188 = vpop.f32.mrb[0].mxu0
  %v189 = vadd.f32 0.0, %v188
  %v190 = vpop.f32.mrb[0].mxu0
  %191 = vmatprep.mubr.f32.mxu0 0.0
  %192 = vmatmul.mubr.f32.gmra.mrb[0].mxu0 %v59
  %v193 = vpop.f32.mrb[0].mxu0
  %v194 = vadd.f32 0.0, %v193
  %v195 = vpop.f32.mrb[0].mxu0
  %196 = vmatprep.mubr.f32.mxu0 0.0
  %197 = vmatmul.mubr.f32.gmra.mrb[0].mxu0 %v60
  %v198 = vpop.f32.mrb[0].mxu0
  %v199 = vadd.f32 0.0, %v198
  %v200 = vpop.f32.mrb[0].mxu0
  %201 = vmatprep.mubr.f32.mxu0 0.0
  %202 = vmatmul.mubr.f32.gmra.mrb[0].mxu0 %v61
  %v203 = vpop.f32.mrb[0].mxu0
  %v204 = vadd.f32 0.0, %v203
  %v205 = vpop.f32.mrb[0].mxu0
  %206 = vmatprep.mubr.f32.mxu0 0.0
  %207 = vmatmul.mubr.f32.gmra.mrb[0].mxu0 %v62
  %v208 = vpop.f32.mrb[0].mxu0
  %v209 = vadd.f32 0.0, %v208
  %v210 = vpop.f32.mrb[0].mxu0
  %211 = vmatprep.mubr.f32.mxu0 0.0
  %212 = vmatmul.mubr.f32.gmra.mrb[0].mxu0 %v63
  %v213 = vpop.f32.mrb[0].mxu0
  %v214 = vadd.f32 0.0, %v213
  %v215 = vpop.f32.mrb[0].mxu0
  %216 = vmatprep.mubr.f32.mxu0 0.0
  %217 = vmatmul.mubr.f32.gmra.mrb[0].mxu0 %v64
  %v218 = vpop.f32.mrb[0].mxu0
  %v219 = vadd.f32 0.0, %v218
  %v220 = vpop.f32.mrb[0].mxu0
  %221 = vmatprep.mubr.f32.mxu0 0.0
  %222 = vmatmul.mubr.f32.gmra.mrb[0].mxu0 %v65
  %v223 = vpop.f32.mrb[0].mxu0
  %v224 = vadd.f32 0.0, %v223
  %v225 = vpop.f32.mrb[0].mxu0
  %226 = vmatprep.mubr.f32.mxu0 0.0
  %227 = vmatmul.mubr.f32.gmra.mrb[0].mxu0 %v66
  %v228 = vpop.f32.mrb[0].mxu0
  %v229 = vadd.f32 0.0, %v228
  %v230 = vpop.f32.mrb[0].mxu0
  %231 = vmatprep.mubr.f32.mxu0 0.0
  %232 = vmatmul.mubr.f32.gmra.mrb[0].mxu0 %v67
  %v233 = vpop.f32.mrb[0].mxu0
  %v234 = vadd.f32 0.0, %v233
  %v235 = vpop.f32.mrb[0].mxu0
  %236 = vmatprep.mubr.f32.mxu0 0.0
  %237 = vmatmul.mubr.f32.gmra.mrb[0].mxu0 %v68
  %v238 = vpop.f32.mrb[0].mxu0
  %v239 = vadd.f32 0.0, %v238
  %v240 = vpop.f32.mrb[0].mxu0
  %241 = vmatprep.mubr.f32.mxu0 0.0
  %242 = vmatmul.mubr.f32.gmra.mrb[0].mxu0 %v69
  %v243 = vpop.f32.mrb[0].mxu0
  %v244 = vadd.f32 0.0, %v243
  %v245 = vpop.f32.mrb[0].mxu0
  %246 = vdwg.mxu0
  %v247 = vadd.f32 %v70, %v169
  %v248 = vadd.f32 %v71, %v174
  %v249 = vadd.f32 %v72, %v179
  %v250 = vadd.f32 %v73, %v184
  %v251 = vadd.f32 %v74, %v189
  %v252 = vadd.f32 %v75, %v194
  %v253 = vadd.f32 %v76, %v199
  %v254 = vadd.f32 %v77, %v204
  %v255 = vadd.f32 %v78, %v209
  %v256 = vadd.f32 %v79, %v214
  %v257 = vadd.f32 %v80, %v219
  %v258 = vadd.f32 %v81, %v224
  %v259 = vadd.f32 %v82, %v229
  %v260 = vadd.f32 %v83, %v234
  %v261 = vadd.f32 %v84, %v239
  %v262 = vadd.f32 %v85, %v244
  %263 = vst [vmem:[%s3] sm:$0xff] %v247
  %264 = vst [vmem:[%s3 + $0x8] sm:$0xff] %v248
  %265 = vst [vmem:[%s3 + $0x10] sm:$0xff] %v249
  %266 = vst [vmem:[%s3 + $0x18] sm:$0xff] %v250
  %267 = vst [vmem:[%s3 + $0x20] sm:$0xff] %v251
  %268 = vst [vmem:[%s3 + $0x28] sm:$0xff] %v252
  %269 = vst [vmem:[%s3 + $0x30] sm:$0xff] %v253
  %270 = vst [vmem:[%s3 + $0x38] sm:$0xff] %v254
  %271 = vst [vmem:[%s3 + $0x40] sm:$0xff] %v255
  %272 = vst [vmem:[%s3 + $0x48] sm:$0xff] %v256
  %273 = vst [vmem:[%s3 + $0x50] sm:$0xff] %v257
  %274 = vst [vmem:[%s3 + $0x58] sm:$0xff] %v258
  %275 = vst [vmem:[%s3 + $0x60] sm:$0xff] %v259
  %276 = vst [vmem:[%s3 + $0x68] sm:$0xff] %v260
  %277 = vst [vmem:[%s3 + $0x70] sm:$0xff] %v261
  %278 = vst [vmem:[%s3 + $0x78] sm:$0xff] %v262
  // Predicated region
  $region18: #{forward.1} parent=0 // pred_check
    %p279 = pneg %p14
  $region19: #{forward.1} parent=0 // pred_check_branch
    %281 = sbr.rel (%p279) target = $region21
  $region20: #{forward.1} parent=0 // pred_region
    %v282 = vld [vmem:[%s3] sm:$0xff]
    %v283 = vld [vmem:[%s3 + $0x8] sm:$0xff]
    %v284 = vld [vmem:[%s3 + $0x10] sm:$0xff]
    %v285 = vld [vmem:[%s3 + $0x18] sm:$0xff]
    %v286 = vld [vmem:[%s3 + $0x20] sm:$0xff]
    %v287 = vld [vmem:[%s3 + $0x28] sm:$0xff]
    %v288 = vld [vmem:[%s3 + $0x30] sm:$0xff]
    %v289 = vld [vmem:[%s3 + $0x38] sm:$0xff]
    %v290 = vld [vmem:[%s3 + $0x40] sm:$0xff]
    %v291 = vld [vmem:[%s3 + $0x48] sm:$0xff]
    %v292 = vld [vmem:[%s3 + $0x50] sm:$0xff]
    %v293 = vld [vmem:[%s3 + $0x58] sm:$0xff]
    %v294 = vld [vmem:[%s3 + $0x60] sm:$0xff]
    %v295 = vld [vmem:[%s3 + $0x68] sm:$0xff]
    %v296 = vld [vmem:[%s3 + $0x70] sm:$0xff]
    %v297 = vld [vmem:[%s3 + $0x78] sm:$0xff]
    %v298 = vld [vmem:[%s2] sm:$0xff]
    %v299 = vld [vmem:[%s2 + $0x8] sm:$0xff]
    %v300 = vld [vmem:[%s2 + $0x10] sm:$0xff]
    %v301 = vld [vmem:[%s2 + $0x18] sm:$0xff]
    %v302 = vld [vmem:[%s2 + $0x20] sm:$0xff]
    %v303 = vld [vmem:[%s2 + $0x28] sm:$0xff]
    %v304 = vld [vmem:[%s2 + $0x30] sm:$0xff]
    %v305 = vld [vmem:[%s2 + $0x38] sm:$0xff]
    %v306 = vld [vmem:[%s2 + $0x40] sm:$0xff]
    %v307 = vld [vmem:[%s2 + $0x48] sm:$0xff]
    %v308 = vld [vmem:[%s2 + $0x50] sm:$0xff]
    %v309 = vld [vmem:[%s2 + $0x58] sm:$0xff]
    %v310 = vld [vmem:[%s2 + $0x60] sm:$0xff]
    %v311 = vld [vmem:[%s2 + $0x68] sm:$0xff]
    %v312 = vld [vmem:[%s2 + $0x70] sm:$0xff]
    %v313 = vld [vmem:[%s2 + $0x78] sm:$0xff]
    %315 = vset.pattern.permute.xlu0 0
    %316 = vperm.xlu0 %315, %v298
    %v317 = vpop.permute.xlu0 %316
    %320 = vset.pattern.permute.xlu0 0
    %321 = vperm.xlu0 %320, %v299
    %v322 = vpop.permute.xlu0 %321
    %325 = vset.pattern.permute.xlu0 0
    %326 = vperm.xlu0 %325, %v300
    %v327 = vpop.permute.xlu0 %326
    %330 = vset.pattern.permute.xlu0 0
    %331 = vperm.xlu0 %330, %v301
    %v332 = vpop.permute.xlu0 %331
    %335 = vset.pattern.permute.xlu0 0
    %336 = vperm.xlu0 %335, %v302
    %v337 = vpop.permute.xlu0 %336
    %340 = vset.pattern.permute.xlu0 0
    %341 = vperm.xlu0 %340, %v303
    %v342 = vpop.permute.xlu0 %341
    %345 = vset.pattern.permute.xlu0 0
    %346 = vperm.xlu0 %345, %v304
    %v347 = vpop.permute.xlu0 %346
    %350 = vset.pattern.permute.xlu0 0
    %351 = vperm.xlu0 %350, %v305
    %v352 = vpop.permute.xlu0 %351
    %355 = vset.pattern.permute.xlu0 0
    %356 = vperm.xlu0 %355, %v306
    %v357 = vpop.permute.xlu0 %356
    %360 = vset.pattern.permute.xlu0 0
    %361 = vperm.xlu0 %360, %v307
    %v362 = vpop.permute.xlu0 %361
    %365 = vset.pattern.permute.xlu0 0
    %366 = vperm.xlu0 %365, %v308
    %v367 = vpop.permute.xlu0 %366
    %370 = vset.pattern.permute.xlu0 0
    %371 = vperm.xlu0 %370, %v309
    %v372 = vpop.permute.xlu0 %371
    %375 = vset.pattern.permute.xlu0 0
    %376 = vperm.xlu0 %375, %v310
    %v377 = vpop.permute.xlu0 %376
    %380 = vset.pattern.permute.xlu0 0
    %381 = vperm.xlu0 %380, %v311
    %v382 = vpop.permute.xlu0 %381
    %385 = vset.pattern.permute.xlu0 0
    %386 = vperm.xlu0 %385, %v312
    %v387 = vpop.permute.xlu0 %386
    %390 = vset.pattern.permute.xlu0 0
    %391 = vperm.xlu0 %390, %v313
    %v392 = vpop.permute.xlu0 %391
    %v394 = vmul.f32 %v282, %v317
    %v395 = vmul.f32 %v283, %v322
    %v396 = vmul.f32 %v284, %v327
    %v397 = vmul.f32 %v285, %v332
    %v398 = vmul.f32 %v286, %v337
    %v399 = vmul.f32 %v287, %v342
    %v400 = vmul.f32 %v288, %v347
    %v401 = vmul.f32 %v289, %v352
    %v402 = vmul.f32 %v290, %v357
    %v403 = vmul.f32 %v291, %v362
    %v404 = vmul.f32 %v292, %v367
    %v405 = vmul.f32 %v293, %v372
    %v406 = vmul.f32 %v294, %v377
    %v407 = vmul.f32 %v295, %v382
    %v408 = vmul.f32 %v296, %v387
    %v409 = vmul.f32 %v297, %v392
    %410 = vst [vmem:[%s3] sm:$0xff] %v394
    %411 = vst [vmem:[%s3 + $0x8] sm:$0xff] %v395
    %412 = vst [vmem:[%s3 + $0x10] sm:$0xff] %v396
    %413 = vst [vmem:[%s3 + $0x18] sm:$0xff] %v397
    %414 = vst [vmem:[%s3 + $0x20] sm:$0xff] %v398
    %415 = vst [vmem:[%s3 + $0x28] sm:$0xff] %v399
    %416 = vst [vmem:[%s3 + $0x30] sm:$0xff] %v400
    %417 = vst [vmem:[%s3 + $0x38] sm:$0xff] %v401
    %418 = vst [vmem:[%s3 + $0x40] sm:$0xff] %v402
    %419 = vst [vmem:[%s3 + $0x48] sm:$0xff] %v403
    %420 = vst [vmem:[%s3 + $0x50] sm:$0xff] %v404
    %421 = vst [vmem:[%s3 + $0x58] sm:$0xff] %v405
    %422 = vst [vmem:[%s3 + $0x60] sm:$0xff] %v406
    %423 = vst [vmem:[%s3 + $0x68] sm:$0xff] %v407
    %424 = vst [vmem:[%s3 + $0x70] sm:$0xff] %v408
    %425 = vst [vmem:[%s3 + $0x78] sm:$0xff] %v409
  $region21: #{forward.1} parent=0 // pred_fallthru
    _
  // Predicated region
  $region22: #{forward.1} parent=0 // pred_check
    _
  $region23: #{forward.1} parent=0 // pred_check_branch
    %427 = sbr.rel (0) target = $region25
  $region24: #{forward.1} parent=0 // pred_region
    _
  $region25: #{forward.1} parent=0 // pred_fallthru
    _
  // Predicated region
  $region26: #{forward.1} parent=0 // pred_check
    _
  $region27: #{forward.1} parent=0 // pred_check_branch
    %429 = sbr.rel (0) target = $region29
  $region28: #{forward.1} parent=0 // pred_region
    _
  $region29: #{forward.1} parent=0 // pred_fallthru
    _

</llo_original>
